<compile_context>
chip_gen: v7x
topology: tpu7x:2x2x1
jax: 0.10.0
libtpu: 0.0.40
codegen_flags: <defaults>
</compile_context>

<pallas_src>
import functools

import jax
import jax.numpy as jnp
from jax import lax
from jax.experimental import pallas as pl
from jax.experimental.pallas import tpu as pltpu


def _resblock_kernel(x_ref, xh_ref, m_ref, w1_ref, b1_ref, w2_ref, b2_ref, o_ref):
    """Fused 1x1conv+BN -> 3x3conv(pad=1)+BN -> residual add for one row tile.

    x_ref : (1, Cin, TH*W)     flattened spatial tile (lane axis = TH*W)
    xh_ref: (1, 1, 2*Cin, W)   x rows just above / below the tile (zeros off-image)
    m_ref : (2, TH*W)          column masks (row 0: x!=0, row 1: x!=W-1)
    w1_ref: (C1, Cin)          1x1 weights with BN1 scale folded in
    b1_ref: (C1, 1)            BN1 shift
    w2_ref: (Cout, 9*C1)       3x3 weights (BN2 scale folded), rows ordered (ky,kx,c1)
    b2_ref: (Cout, 1)          BN2 shift
    o_ref : (1, Cout, TH*W)
    """
    _, Cin, THW = x_ref.shape
    W = xh_ref.shape[-1]
    C1 = w1_ref.shape[0]

    x2d = x_ref[...][0]                      # (Cin, TH*W)
    w1 = w1_ref[...]
    b1 = b1_ref[...]

    # ---- conv1 (1x1) + folded BN: single MXU matmul, lane-dense output ----
    h_main = jnp.dot(w1, x2d, preferred_element_type=jnp.float32) + b1   # (C1, TH*W)

    # conv1 on the two halo rows (recomputed here; 1x1 conv is cheap).  Rows
    # outside the image must contribute h == 0 (true zero padding, NOT b1),
    # so mask by tile position.
    xh = xh_ref[...][0, 0]                   # (2*Cin, W)
    i = pl.program_id(1)
    valid_top = jnp.where(i > 0, 1.0, 0.0).astype(jnp.float32)
    valid_bot = jnp.where(i < pl.num_programs(1) - 1, 1.0, 0.0).astype(jnp.float32)
    h_top = (jnp.dot(w1, xh[:Cin], preferred_element_type=jnp.float32) + b1) * valid_top
    h_bot = (jnp.dot(w1, xh[Cin:], preferred_element_type=jnp.float32) + b1) * valid_bot

    # Flattened hidden rows [-1 .. TH] with one zero lane on each end so every
    # 3x3 tap below is an in-bounds *static* lane-offset slice (shifts go to
    # the XLU; no padded VMEM scratch, no strided interior stores).
    zcol = jnp.zeros((C1, 1), jnp.float32)
    hext = jnp.concatenate([zcol, h_top, h_main, h_bot, zcol], axis=1)  # (C1, (TH+2)*W+2)

    # ---- conv2 (3x3, stride 1, pad 1) as ONE im2col matmul, K = 9*C1 ----
    mask_l = m_ref[0:1, :]      # zeroes column x == 0     (for kx == 0 taps)
    mask_r = m_ref[1:2, :]      # zeroes column x == W - 1 (for kx == 2 taps)
    taps = []
    for ky in range(3):
        for kx in range(3):
            off = ky * W + kx
            t = hext[:, off:off + THW]       # (C1, TH*W)
            if kx == 0:
                t = t * mask_l
            elif kx == 2:
                t = t * mask_r
            taps.append(t)
    patches = jnp.concatenate(taps, axis=0)  # (9*C1, TH*W)

    out = jnp.dot(w2_ref[...], patches, preferred_element_type=jnp.float32)  # (Cout, TH*W)
    out = out + b2_ref[...] + x2d            # folded BN2 shift + residual add
    o_ref[0] = out.astype(o_ref.dtype)


def _choose_row_tile(H, W, Cin, C1, Cout, row_tile=None, vmem_budget_bytes=8 << 20):
    """Pick TH: H % TH == 0 and TH*W lane-aligned (mult of 128, or TH == H),
    bounded by a conservative VMEM budget (v7x has only 64 MiB physical /
    32 MiB default scoped VMEM shared by 2 TensorCores; v5e/v6e have 128 MiB)."""
    def ok(th):
        return H % th == 0 and ((th * W) % 128 == 0 or th == H)

    if row_tile is not None and ok(row_tile):
        return row_tile
    # ~f32 bytes per output row of the working set (double-buffered x/out
    # blocks + hidden / im2col taps).
    per_row = 4 * W * (2 * Cin + 2 * Cout + 11 * C1)
    best = None
    for th in range(1, H + 1):
        if ok(th) and th * per_row <= vmem_budget_bytes:
            best = th
    return best if best is not None else H


def residual_block_pallas(x_nchw, params, row_tile=None):
    """x_nchw: (N, Cin, H, W) float32 (PyTorch layout). Returns NCHW output."""
    N, Cin, H, W = x_nchw.shape
    w1f, b1, w2f, b2 = params
    C1 = w1f.shape[0]
    Cout = w2f.shape[0]
    assert Cout == Cin, "residual add requires out_channels == in_channels"

    TH = _choose_row_tile(H, W, Cin, C1, Cout, row_tile)
    T = H // TH

    # Free reshape (trailing-dims merge): every block's lane axis is TH*W.
    x2d = x_nchw.reshape(N, Cin, H * W)

    # Halo rows: the single x row above / below each tile (zeros off-image).
    # Tiny side input: N * T * 2 * Cin * W elements.
    xp = jnp.pad(x_nchw, ((0, 0), (0, 0), (1, 1), (0, 0)))
    rows_top = jnp.arange(T) * TH                      # padded-coord row above each tile
    halo_top = xp[:, :, rows_top, :]                   # (N, Cin, T, W)
    halo_bot = xp[:, :, rows_top + TH + 1, :]          # (N, Cin, T, W)
    x_halo = jnp.transpose(jnp.concatenate([halo_top, halo_bot], axis=1),
                           (0, 2, 1, 3))               # (N, T, 2*Cin, W)

    # Column-boundary masks for the 3x3 taps.
    col = jnp.arange(TH * W, dtype=jnp.int32) % W
    masks = jnp.stack([(col != 0), (col != W - 1)]).astype(jnp.float32)   # (2, TH*W)

    flops = 2 * N * H * W * (Cin * C1 + 9 * C1 * Cout)
    bytes_accessed = 4 * (x2d.size + N * Cout * H * W + x_halo.size + masks.size
                          + w1f.size + b1.size + w2f.size + b2.size)

    out2d = pl.pallas_call(
        _resblock_kernel,
        out_shape=jax.ShapeDtypeStruct((N, Cout, H * W), x_nchw.dtype),
        grid=(N, T),
        in_specs=[
            pl.BlockSpec((1, Cin, TH * W), lambda n, i: (n, 0, i)),       # x tile
            pl.BlockSpec((1, 1, 2 * Cin, W), lambda n, i: (n, i, 0, 0)),  # halo rows
            pl.BlockSpec((2, TH * W), lambda n, i: (0, 0)),               # column masks
            pl.BlockSpec((C1, Cin), lambda n, i: (0, 0)),                 # w1 (BN1 folded)
            pl.BlockSpec((C1, 1), lambda n, i: (0, 0)),                   # BN1 shift
            pl.BlockSpec((Cout, 9 * C1), lambda n, i: (0, 0)),            # w2 im2col (BN2 folded)
            pl.BlockSpec((Cout, 1), lambda n, i: (0, 0)),                 # BN2 shift
        ],
        out_specs=pl.BlockSpec((1, Cout, TH * W), lambda n, i: (n, 0, i)),
        compiler_params=pltpu.CompilerParams(
            dimension_semantics=("parallel", "parallel")),
        cost_estimate=pl.CostEstimate(flops=flops, transcendentals=0,
                                      bytes_accessed=bytes_accessed),
    )(x2d, x_halo, masks, w1f, b1, w2f, b2)

    return out2d.reshape(N, Cout, H, W)


def make_params(key, in_channels, ch1x1, out_channels, eps=1e-5):
    """Deterministic synthetic parameters (PyTorch shapes -> kernel layout)."""
    ks = jax.random.split(key, 10)
    # conv1: (C1, Cin, 1, 1), no bias (BN follows)
    w1_t = jax.random.normal(ks[0], (ch1x1, in_channels, 1, 1), jnp.float32) * 0.1
    g1 = jax.random.normal(ks[1], (ch1x1,), jnp.float32) * 0.1 + 1.0
    be1 = jax.random.normal(ks[2], (ch1x1,), jnp.float32) * 0.1
    m1 = jax.random.normal(ks[3], (ch1x1,), jnp.float32) * 0.1
    v1 = jax.random.uniform(ks[4], (ch1x1,), jnp.float32, 0.5, 1.5)
    # conv2: (Cout, C1, 3, 3), no bias (BN follows)
    w2_t = jax.random.normal(ks[5], (out_channels, ch1x1, 3, 3), jnp.float32) * 0.1
    g2 = jax.random.normal(ks[6], (out_channels,), jnp.float32) * 0.1 + 1.0
    be2 = jax.random.normal(ks[7], (out_channels,), jnp.float32) * 0.1
    m2 = jax.random.normal(ks[8], (out_channels,), jnp.float32) * 0.1
    v2 = jax.random.uniform(ks[9], (out_channels,), jnp.float32, 0.5, 1.5)

    # Fold BN (inference): scale = gamma / sqrt(var+eps); shift = beta - mean*scale
    s1 = g1 / jnp.sqrt(v1 + eps)
    b1 = be1 - m1 * s1
    s2 = g2 / jnp.sqrt(v2 + eps)
    b2 = be2 - m2 * s2

    # Kernel layouts with the BN *scale* folded into the conv weights.
    w1f = w1_t[:, :, 0, 0] * s1[:, None]                                  # (C1, Cin)
    w2f = (jnp.transpose(w2_t, (0, 2, 3, 1)).reshape(out_channels, 9 * ch1x1)
           * s2[:, None])                                                 # (Cout, 9*C1)
    kernel_params = (w1f, b1[:, None], w2f, b2[:, None])
    torch_like = (w1_t, s1, b1, w2_t, s2, b2)
    return kernel_params, torch_like


def reference_forward(x_nchw, torch_like):
    """Pure-JAX reference matching PyTorch conv semantics (NCHW / OIHW)."""
    w1_t, s1, b1, w2_t, s2, b2 = torch_like
    dn = ('NCHW', 'OIHW', 'NCHW')
    h = lax.conv_general_dilated(x_nchw, w1_t, (1, 1), 'VALID',
                                 dimension_numbers=dn)
    h = h * s1[None, :, None, None] + b1[None, :, None, None]
    y = lax.conv_general_dilated(h, w2_t, (1, 1), ((1, 1), (1, 1)),
                                 dimension_numbers=dn)
    y = y * s2[None, :, None, None] + b2[None, :, None, None]
    return y + x_nchw


if __name__ == "__main__":
    N, Cin, H, W = 2, 4, 16, 16
    ch1x1 = 8
    Cout = Cin  # residual add requires matching channels

    key = jax.random.PRNGKey(0)
    kx, kp = jax.random.split(key)
    x = jax.random.normal(kx, (N, Cin, H, W), jnp.float32)

    kernel_params, torch_like = make_params(kp, Cin, ch1x1, Cout)

    # row_tile=8 -> grid (2, 2): exercises the halo path and row pipelining.
    out = residual_block_pallas(x, kernel_params, row_tile=8)
    out = jax.block_until_ready(out)

    ref = reference_forward(x, torch_like)
    assert out.shape == (N, Cout, H, W)
    assert jnp.allclose(out, ref, atol=1e-4, rtol=1e-4), "mismatch vs reference"

    print("KERNEL_OK")
</pallas_src>

<mosaic_0001>
module attributes {stable_mosaic.version = 11 : i64} {
  func.func @_resblock_kernel(%arg0: i32, %arg1: i32, %arg2: memref<1x4x128xf32, #tpu.memory_space<vmem>>, %arg3: memref<1x1x8x16xf32, #tpu.memory_space<vmem>>, %arg4: memref<2x128xf32, #tpu.memory_space<vmem>>, %arg5: memref<8x4xf32, #tpu.memory_space<vmem>>, %arg6: memref<8x1xf32, #tpu.memory_space<vmem>>, %arg7: memref<4x72xf32, #tpu.memory_space<vmem>>, %arg8: memref<4x1xf32, #tpu.memory_space<vmem>>, %arg9: memref<1x4x128xf32, #tpu.memory_space<vmem>>) attributes {dimension_semantics = [#tpu.dimension_semantics<parallel>, #tpu.dimension_semantics<parallel>], iteration_bounds = array<i64: 2, 2>, scalar_prefetch = 0 : i64, scratch_operands = 0 : i64, tpu.core_type = #tpu.core_type<tc>, window_params = [{transform_indices = @transform_0, window_bounds = array<i64: 1, 4, 128>}, {transform_indices = @transform_1, window_bounds = array<i64: 1, 1, 8, 16>}, {pipeline_mode = #tpu.pipeline_mode<synchronous>, transform_indices = @transform_2, window_bounds = array<i64: 2, 128>}, {pipeline_mode = #tpu.pipeline_mode<synchronous>, transform_indices = @transform_3, window_bounds = array<i64: 8, 4>}, {pipeline_mode = #tpu.pipeline_mode<synchronous>, transform_indices = @transform_4, window_bounds = array<i64: 8, 1>}, {pipeline_mode = #tpu.pipeline_mode<synchronous>, transform_indices = @transform_5, window_bounds = array<i64: 4, 72>}, {pipeline_mode = #tpu.pipeline_mode<synchronous>, transform_indices = @transform_6, window_bounds = array<i64: 4, 1>}, {transform_indices = @transform_7, window_bounds = array<i64: 1, 4, 128>}]} {
    %c0 = arith.constant 0 : index
    %c0_0 = arith.constant 0 : index
    %c0_1 = arith.constant 0 : index
    %0 = vector.load %arg2[%c0, %c0_0, %c0_1] : memref<1x4x128xf32, #tpu.memory_space<vmem>>, vector<1x4x128xf32>
    %1 = vector.shape_cast %0 : vector<1x4x128xf32> to vector<4x128xf32>
    %c0_2 = arith.constant 0 : index
    %c0_3 = arith.constant 0 : index
    %2 = vector.load %arg5[%c0_2, %c0_3] : memref<8x4xf32, #tpu.memory_space<vmem>>, vector<8x4xf32>
    %c0_4 = arith.constant 0 : index
    %c0_5 = arith.constant 0 : index
    %3 = vector.load %arg6[%c0_4, %c0_5] : memref<8x1xf32, #tpu.memory_space<vmem>>, vector<8x1xf32>
    %cst = arith.constant dense<0.000000e+00> : vector<8x128xf32>
    %4 = tpu.matmul %2, %1, %cst {dimension_numbers = #tpu.dot_dimension_numbers<[1], [0], [0], [1], [0, 0, 1, 1], [], []>} : vector<8x4xf32>, vector<4x128xf32>, vector<8x128xf32> -> vector<8x128xf32>
    %5 = vector.broadcast %3 : vector<8x1xf32> to vector<8x128xf32>
    %6 = arith.addf %4, %5 : vector<8x128xf32>
    %c0_6 = arith.constant 0 : index
    %c0_7 = arith.constant 0 : index
    %c0_8 = arith.constant 0 : index
    %c0_9 = arith.constant 0 : index
    %7 = vector.load %arg3[%c0_6, %c0_7, %c0_8, %c0_9] : memref<1x1x8x16xf32, #tpu.memory_space<vmem>>, vector<1x1x8x16xf32>
    %8 = vector.shape_cast %7 : vector<1x1x8x16xf32> to vector<8x16xf32>
    %c0_i32 = arith.constant 0 : i32
    %9 = arith.cmpi sgt, %arg1, %c0_i32 : i32
    %cst_10 = arith.constant 1.000000e+00 : f32
    %cst_11 = arith.constant 0.000000e+00 : f32
    %10 = arith.select %9, %cst_10, %cst_11 : f32
    %c1_i32 = arith.constant 1 : i32
    %11 = arith.cmpi slt, %arg1, %c1_i32 : i32
    %cst_12 = arith.constant 1.000000e+00 : f32
    %cst_13 = arith.constant 0.000000e+00 : f32
    %12 = arith.select %11, %cst_12, %cst_13 : f32
    %13 = vector.extract_strided_slice %8 {offsets = [0, 0], sizes = [4, 16], strides = [1, 1]} : vector<8x16xf32> to vector<4x16xf32>
    %cst_14 = arith.constant dense<0.000000e+00> : vector<8x16xf32>
    %14 = tpu.matmul %2, %13, %cst_14 {dimension_numbers = #tpu.dot_dimension_numbers<[1], [0], [0], [1], [0, 0, 1, 1], [], []>} : vector<8x4xf32>, vector<4x16xf32>, vector<8x16xf32> -> vector<8x16xf32>
    %15 = vector.broadcast %3 : vector<8x1xf32> to vector<8x16xf32>
    %16 = arith.addf %14, %15 : vector<8x16xf32>
    %17 = vector.broadcast %10 : f32 to vector<8x16xf32>
    %18 = arith.mulf %16, %17 : vector<8x16xf32>
    %19 = vector.extract_strided_slice %8 {offsets = [4, 0], sizes = [4, 16], strides = [1, 1]} : vector<8x16xf32> to vector<4x16xf32>
    %cst_15 = arith.constant dense<0.000000e+00> : vector<8x16xf32>
    %20 = tpu.matmul %2, %19, %cst_15 {dimension_numbers = #tpu.dot_dimension_numbers<[1], [0], [0], [1], [0, 0, 1, 1], [], []>} : vector<8x4xf32>, vector<4x16xf32>, vector<8x16xf32> -> vector<8x16xf32>
    %21 = vector.broadcast %3 : vector<8x1xf32> to vector<8x16xf32>
    %22 = arith.addf %20, %21 : vector<8x16xf32>
    %23 = vector.broadcast %12 : f32 to vector<8x16xf32>
    %24 = arith.mulf %22, %23 : vector<8x16xf32>
    %cst_16 = arith.constant 0.000000e+00 : f32
    %25 = vector.broadcast %cst_16 : f32 to vector<8x1xf32>
    %26 = tpu.concatenate %25, %18, %6, %24, %25 in 1 : vector<8x1xf32>, vector<8x16xf32>, vector<8x128xf32>, vector<8x16xf32>, vector<8x1xf32> -> vector<8x162xf32>
    %c0_17 = arith.constant 0 : index
    %c0_18 = arith.constant 0 : index
    %27 = vector.load %arg4[%c0_17, %c0_18] : memref<2x128xf32, #tpu.memory_space<vmem>>, vector<1x128xf32>
    %c1 = arith.constant 1 : index
    %c0_19 = arith.constant 0 : index
    %28 = vector.load %arg4[%c1, %c0_19] : memref<2x128xf32, #tpu.memory_space<vmem>>, vector<1x128xf32>
    %29 = vector.extract_strided_slice %26 {offsets = [0, 0], sizes = [8, 128], strides = [1, 1]} : vector<8x162xf32> to vector<8x128xf32>
    %30 = vector.broadcast %27 : vector<1x128xf32> to vector<8x128xf32>
    %31 = arith.mulf %29, %30 : vector<8x128xf32>
    %32 = vector.extract_strided_slice %26 {offsets = [0, 1], sizes = [8, 128], strides = [1, 1]} : vector<8x162xf32> to vector<8x128xf32>
    %33 = vector.extract_strided_slice %26 {offsets = [0, 2], sizes = [8, 128], strides = [1, 1]} : vector<8x162xf32> to vector<8x128xf32>
    %34 = vector.broadcast %28 : vector<1x128xf32> to vector<8x128xf32>
    %35 = arith.mulf %33, %34 : vector<8x128xf32>
    %36 = vector.extract_strided_slice %26 {offsets = [0, 16], sizes = [8, 128], strides = [1, 1]} : vector<8x162xf32> to vector<8x128xf32>
    %37 = vector.broadcast %27 : vector<1x128xf32> to vector<8x128xf32>
    %38 = arith.mulf %36, %37 : vector<8x128xf32>
    %39 = vector.extract_strided_slice %26 {offsets = [0, 17], sizes = [8, 128], strides = [1, 1]} : vector<8x162xf32> to vector<8x128xf32>
    %40 = vector.extract_strided_slice %26 {offsets = [0, 18], sizes = [8, 128], strides = [1, 1]} : vector<8x162xf32> to vector<8x128xf32>
    %41 = vector.broadcast %28 : vector<1x128xf32> to vector<8x128xf32>
    %42 = arith.mulf %40, %41 : vector<8x128xf32>
    %43 = vector.extract_strided_slice %26 {offsets = [0, 32], sizes = [8, 128], strides = [1, 1]} : vector<8x162xf32> to vector<8x128xf32>
    %44 = vector.broadcast %27 : vector<1x128xf32> to vector<8x128xf32>
    %45 = arith.mulf %43, %44 : vector<8x128xf32>
    %46 = vector.extract_strided_slice %26 {offsets = [0, 33], sizes = [8, 128], strides = [1, 1]} : vector<8x162xf32> to vector<8x128xf32>
    %47 = vector.extract_strided_slice %26 {offsets = [0, 34], sizes = [8, 128], strides = [1, 1]} : vector<8x162xf32> to vector<8x128xf32>
    %48 = vector.broadcast %28 : vector<1x128xf32> to vector<8x128xf32>
    %49 = arith.mulf %47, %48 : vector<8x128xf32>
    %50 = tpu.concatenate %31, %32, %35, %38, %39, %42, %45, %46, %49 in 0 : vector<8x128xf32>, vector<8x128xf32>, vector<8x128xf32>, vector<8x128xf32>, vector<8x128xf32>, vector<8x128xf32>, vector<8x128xf32>, vector<8x128xf32>, vector<8x128xf32> -> vector<72x128xf32>
    %c0_20 = arith.constant 0 : index
    %c0_21 = arith.constant 0 : index
    %51 = vector.load %arg7[%c0_20, %c0_21] : memref<4x72xf32, #tpu.memory_space<vmem>>, vector<4x72xf32>
    %cst_22 = arith.constant dense<0.000000e+00> : vector<4x128xf32>
    %52 = tpu.matmul %51, %50, %cst_22 {dimension_numbers = #tpu.dot_dimension_numbers<[1], [0], [0], [1], [0, 0, 1, 1], [], []>} : vector<4x72xf32>, vector<72x128xf32>, vector<4x128xf32> -> vector<4x128xf32>
    %c0_23 = arith.constant 0 : index
    %c0_24 = arith.constant 0 : index
    %53 = vector.load %arg8[%c0_23, %c0_24] : memref<4x1xf32, #tpu.memory_space<vmem>>, vector<4x1xf32>
    %54 = vector.broadcast %53 : vector<4x1xf32> to vector<4x128xf32>
    %55 = arith.addf %52, %54 : vector<4x128xf32>
    %56 = arith.addf %55, %1 : vector<4x128xf32>
    %c0_25 = arith.constant 0 : index
    %c0_26 = arith.constant 0 : index
    %c0_27 = arith.constant 0 : index
    %57 = vector.load %arg9[%c0_25, %c0_26, %c0_27] : memref<1x4x128xf32, #tpu.memory_space<vmem>>, vector<1x4x128xf32>
    %58 = vector.shape_cast %57 : vector<1x4x128xf32> to vector<4x128xf32>
    %59 = vector.shape_cast %56 : vector<4x128xf32> to vector<1x4x128xf32>
    tpu.vector_store %arg9[%c0_25, %c0_26, %c0_27], %59 {strides = array<i32>} : memref<1x4x128xf32, #tpu.memory_space<vmem>>, vector<1x4x128xf32>,
    return
  }
  func.func @transform_0(%arg0: i32, %arg1: i32) -> (i32, i32, i32) {
    %c0_i32 = arith.constant 0 : i32
    %c0_i32_0 = arith.constant 0 : i32
    return %arg0, %c0_i32, %arg1 : i32, i32, i32
  }
  func.func @transform_1(%arg0: i32, %arg1: i32) -> (i32, i32, i32, i32) {
    %c0_i32 = arith.constant 0 : i32
    %c0_i32_0 = arith.constant 0 : i32
    %c0_i32_1 = arith.constant 0 : i32
    return %arg0, %arg1, %c0_i32, %c0_i32_0 : i32, i32, i32, i32
  }
  func.func @transform_2(%arg0: i32, %arg1: i32) -> (i32, i32) {
    %c0_i32 = arith.constant 0 : i32
    %c0_i32_0 = arith.constant 0 : i32
    %c0_i32_1 = arith.constant 0 : i32
    return %c0_i32, %c0_i32_0 : i32, i32
  }
  func.func @transform_3(%arg0: i32, %arg1: i32) -> (i32, i32) {
    %c0_i32 = arith.constant 0 : i32
    %c0_i32_0 = arith.constant 0 : i32
    %c0_i32_1 = arith.constant 0 : i32
    return %c0_i32, %c0_i32_0 : i32, i32
  }
  func.func @transform_4(%arg0: i32, %arg1: i32) -> (i32, i32) {
    %c0_i32 = arith.constant 0 : i32
    %c0_i32_0 = arith.constant 0 : i32
    %c0_i32_1 = arith.constant 0 : i32
    return %c0_i32, %c0_i32_0 : i32, i32
  }
  func.func @transform_5(%arg0: i32, %arg1: i32) -> (i32, i32) {
    %c0_i32 = arith.constant 0 : i32
    %c0_i32_0 = arith.constant 0 : i32
    %c0_i32_1 = arith.constant 0 : i32
    return %c0_i32, %c0_i32_0 : i32, i32
  }
  func.func @transform_6(%arg0: i32, %arg1: i32) -> (i32, i32) {
    %c0_i32 = arith.constant 0 : i32
    %c0_i32_0 = arith.constant 0 : i32
    %c0_i32_1 = arith.constant 0 : i32
    return %c0_i32, %c0_i32_0 : i32, i32
  }
  func.func @transform_7(%arg0: i32, %arg1: i32) -> (i32, i32, i32) {
    %c0_i32 = arith.constant 0 : i32
    %c0_i32_0 = arith.constant 0 : i32
    return %arg0, %c0_i32, %arg1 : i32, i32, i32
  }
}

</mosaic_0001>

<llo_original>
// kernel: tpu_custom_call.1
$region0: #{tpu_custom_call.1}
  #allocation0 [shape = 'u32[]', space=smem, size = 0x4, offset = 0x4, fixed_abs, tag = 'smem constant byte address 0x4 - core index']
  #allocation1 [shape = 'u32[144,128]{1,0:T(1,128)}', space=vmem, size = 0x12000, scoped, tag = 'internal scratch']
  %s0 = inlined_call_operand.vmem [shape: f32[2,4,256], index: 0, kind: input, shape index: {}]
  %s1 = inlined_call_operand.hbm [shape: f32[2,2,8,16], index: 1, kind: input, shape index: {}]
  %s2 = inlined_call_operand.vmem [shape: f32[2,128], index: 2, kind: input, shape index: {}]
  %s3 = inlined_call_operand.vmem [shape: f32[8,4], index: 3, kind: input, shape index: {}]
  %s4 = inlined_call_operand.vmem [shape: f32[8,1], index: 4, kind: input, shape index: {}]
  %s5 = inlined_call_operand.vmem [shape: f32[4,72], index: 5, kind: input, shape index: {}]
  %s6 = inlined_call_operand.vmem [shape: f32[4,1], index: 6, kind: input, shape index: {}]
  %s7 = inlined_call_operand.hbm [shape: f32[2,4,256], index: 7, kind: output, shape index: {}]
  %s8 = sld [smem:[#allocation0]]
  $region65: #{tpu_custom_call.1} parent=0
    _
  %s10 = ssub.s32 1, %s8
  %s11 = scalar_select 0, %s10, %s8
  $region1: #{tpu_custom_call.1} parent=0
    #allocation2 [shape = 'u8[8192]{0}', space=vmem, size = 0x2000, scoped, tag = 'input window, operand 1']
    #allocation3 [shape = 's32[2]{0}', space=sflag, size = 0x8, scoped, tag = 'scoped memory for tpu_custom_call.1']
    #allocation4 [shape = 's32[2]{0}', space=sflag, size = 0x8, scoped, tag = 'scoped memory for tpu_custom_call.1']
    #allocation5 [shape = 'u8[4096]{0}', space=vmem, size = 0x1000, scoped, tag = 'output window, operand 0']
    %12 = vsyncpa [#allocation3], 0
    %s13 = scalar_lea.sflag [#allocation3], 1
    %14 = vsyncpa %s13, 0
    %15 = vsyncpa [#allocation4], 0
    %s16 = scalar_lea.sflag [#allocation4], 1
    %17 = vsyncpa %s16, 0
    loop: start=0, step=1, limit=6
    $region2: #{tpu_custom_call.1} parent=1 // loop_pre_header
      _
    $region3: #{tpu_custom_call.1} parent=1 // loop_header
      %s19 = sphi 0, %s23
      %p20 = scmp.ge.s32.totalorder %s19, 6
      %s26 = sphi 0, %s38
      %s27 = sphi 0, %s34
      %s28 = sphi 0, %s26
      %s29 = sphi 0, %s27
      %s30 = sphi 0, %s28
      %s31 = sphi 0, %s29
      %s43 = sphi 0, %s45
      %s46 = sphi 0, %s43
      %s47 = sphi 0, %s46
      %s63 = sphi 0, %s47
      %s71 = sphi 0, %s73
      %s74 = sphi 0, %s71
      %s75 = sphi 0, %s74
      %s91 = sphi 0, %s75
      %s95 = sphi 0, %s95
      %s97 = sphi 0, %s95
      %s98 = sphi 0, %s97
      %s112 = sphi 0, %s98
      %s116 = sphi 0, %s116
      %s118 = sphi 0, %s116
      %s119 = sphi 0, %s118
      %s133 = sphi 0, %s119
      %s137 = sphi 0, %s137
      %s139 = sphi 0, %s137
      %s140 = sphi 0, %s139
      %s154 = sphi 0, %s140
      %s158 = sphi 0, %s158
      %s160 = sphi 0, %s158
      %s161 = sphi 0, %s160
      %s175 = sphi 0, %s161
      %s179 = sphi 0, %s179
      %s181 = sphi 0, %s179
      %s182 = sphi 0, %s181
      %s196 = sphi 0, %s182
      %s204 = sphi 0, %s206
      %s207 = sphi 0, %s204
      %s208 = sphi 0, %s207
      %s224 = sphi 0, %s208
    $region4: #{tpu_custom_call.1} parent=1 // loop_header_branch
      %22 = sbr.rel (%p20) target = $region8
    $region5: #{tpu_custom_call.1} parent=1 // loop_body
      %s24 = ssub.s32 %s19, 1
      %s25 = ssub.s32 %s19, 2
      %s32 = sadd.s32 1, %s27
      %p33 = scmp.ge.s32.totalorder %s32, 2
      %s34 = scalar_select %p33, 0, %s32
      %s35 = sadd.s32 1, %s26
      %s36 = scalar_select %p33, %s35, %s26
      %p37 = scmp.ge.s32.totalorder %s36, 2
      %s38 = scalar_select %p37, 0, %s36
      %s39 = ssub.s32 %s26, %s38
      %s40 = ssub.s32 %s27, %s34
      %s41 = sor.u32 %s39, %s40
      %p42 = scmp.eq.s32.totalorder %s41, 0
      %s44 = sadd.s32 %s43, 1
      %s45 = scalar_select %p42, %s43, %s44
      %p48 = pneg %p42
      %p49 = scmp.eq.s32.totalorder %s19, 3
      %p50 = por %p48, %p49
      %p51 = scmp.ne.s32.totalorder %s43, %s46
      %p52 = scmp.eq.s32.totalorder %s19, 0
      %p53 = por %p51, %p52
      %p54 = scmp.ne.s32.totalorder %s43, %s46
      %p55 = scmp.eq.s32.totalorder %s24, 3
      %p56 = por %p54, %p55
      %p57 = scmp.ne.s32.totalorder %s46, %s47
      %p58 = scmp.eq.s32.totalorder %s24, 0
      %p59 = por %p57, %p58
      %p60 = scmp.ne.s32.totalorder %s46, %s47
      %p61 = scmp.eq.s32.totalorder %s25, 3
      %p62 = por %p60, %p61
      %p64 = scmp.ne.s32.totalorder %s47, %s63
      %p65 = scmp.eq.s32.totalorder %s25, 0
      %p66 = por %p64, %p65
      %s67 = ssub.s32 %s26, %s38
      %s68 = ssub.s32 %s27, %s34
      %s69 = sor.u32 %s67, %s68
      %p70 = scmp.eq.s32.totalorder %s69, 0
      %s72 = sadd.s32 %s71, 1
      %s73 = scalar_select %p70, %s71, %s72
      %p76 = pneg %p70
      %p77 = scmp.eq.s32.totalorder %s19, 3
      %p78 = por %p76, %p77
      %p79 = scmp.ne.s32.totalorder %s71, %s74
      %p80 = scmp.eq.s32.totalorder %s19, 0
      %p81 = por %p79, %p80
      %p82 = scmp.ne.s32.totalorder %s71, %s74
      %p83 = scmp.eq.s32.totalorder %s24, 3
      %p84 = por %p82, %p83
      %p85 = scmp.ne.s32.totalorder %s74, %s75
      %p86 = scmp.eq.s32.totalorder %s24, 0
      %p87 = por %p85, %p86
      %p88 = scmp.ne.s32.totalorder %s74, %s75
      %p89 = scmp.eq.s32.totalorder %s25, 3
      %p90 = por %p88, %p89
      %p92 = scmp.ne.s32.totalorder %s75, %s91
      %p93 = scmp.eq.s32.totalorder %s25, 0
      %p94 = por %p92, %p93
      %s96 = sadd.s32 %s95, 1
      %p99 = scmp.eq.s32.totalorder %s19, 3
      %p100 = scmp.ne.s32.totalorder %s95, %s97
      %p101 = scmp.eq.s32.totalorder %s19, 0
      %p102 = por %p100, %p101
      %p103 = scmp.ne.s32.totalorder %s95, %s97
      %p104 = scmp.eq.s32.totalorder %s24, 3
      %p105 = por %p103, %p104
      %p106 = scmp.ne.s32.totalorder %s97, %s98
      %p107 = scmp.eq.s32.totalorder %s24, 0
      %p108 = por %p106, %p107
      %p109 = scmp.ne.s32.totalorder %s97, %s98
      %p110 = scmp.eq.s32.totalorder %s25, 3
      %p111 = por %p109, %p110
      %p113 = scmp.ne.s32.totalorder %s98, %s112
      %p114 = scmp.eq.s32.totalorder %s25, 0
      %p115 = por %p113, %p114
      %s117 = sadd.s32 %s116, 1
      %p120 = scmp.eq.s32.totalorder %s19, 3
      %p121 = scmp.ne.s32.totalorder %s116, %s118
      %p122 = scmp.eq.s32.totalorder %s19, 0
      %p123 = por %p121, %p122
      %p124 = scmp.ne.s32.totalorder %s116, %s118
      %p125 = scmp.eq.s32.totalorder %s24, 3
      %p126 = por %p124, %p125
      %p127 = scmp.ne.s32.totalorder %s118, %s119
      %p128 = scmp.eq.s32.totalorder %s24, 0
      %p129 = por %p127, %p128
      %p130 = scmp.ne.s32.totalorder %s118, %s119
      %p131 = scmp.eq.s32.totalorder %s25, 3
      %p132 = por %p130, %p131
      %p134 = scmp.ne.s32.totalorder %s119, %s133
      %p135 = scmp.eq.s32.totalorder %s25, 0
      %p136 = por %p134, %p135
      %s138 = sadd.s32 %s137, 1
      %p141 = scmp.eq.s32.totalorder %s19, 3
      %p142 = scmp.ne.s32.totalorder %s137, %s139
      %p143 = scmp.eq.s32.totalorder %s19, 0
      %p144 = por %p142, %p143
      %p145 = scmp.ne.s32.totalorder %s137, %s139
      %p146 = scmp.eq.s32.totalorder %s24, 3
      %p147 = por %p145, %p146
      %p148 = scmp.ne.s32.totalorder %s139, %s140
      %p149 = scmp.eq.s32.totalorder %s24, 0
      %p150 = por %p148, %p149
      %p151 = scmp.ne.s32.totalorder %s139, %s140
      %p152 = scmp.eq.s32.totalorder %s25, 3
      %p153 = por %p151, %p152
      %p155 = scmp.ne.s32.totalorder %s140, %s154
      %p156 = scmp.eq.s32.totalorder %s25, 0
      %p157 = por %p155, %p156
      %s159 = sadd.s32 %s158, 1
      %p162 = scmp.eq.s32.totalorder %s19, 3
      %p163 = scmp.ne.s32.totalorder %s158, %s160
      %p164 = scmp.eq.s32.totalorder %s19, 0
      %p165 = por %p163, %p164
      %p166 = scmp.ne.s32.totalorder %s158, %s160
      %p167 = scmp.eq.s32.totalorder %s24, 3
      %p168 = por %p166, %p167
      %p169 = scmp.ne.s32.totalorder %s160, %s161
      %p170 = scmp.eq.s32.totalorder %s24, 0
      %p171 = por %p169, %p170
      %p172 = scmp.ne.s32.totalorder %s160, %s161
      %p173 = scmp.eq.s32.totalorder %s25, 3
      %p174 = por %p172, %p173
      %p176 = scmp.ne.s32.totalorder %s161, %s175
      %p177 = scmp.eq.s32.totalorder %s25, 0
      %p178 = por %p176, %p177
      %s180 = sadd.s32 %s179, 1
      %p183 = scmp.eq.s32.totalorder %s19, 3
      %p184 = scmp.ne.s32.totalorder %s179, %s181
      %p185 = scmp.eq.s32.totalorder %s19, 0
      %p186 = por %p184, %p185
      %p187 = scmp.ne.s32.totalorder %s179, %s181
      %p188 = scmp.eq.s32.totalorder %s24, 3
      %p189 = por %p187, %p188
      %p190 = scmp.ne.s32.totalorder %s181, %s182
      %p191 = scmp.eq.s32.totalorder %s24, 0
      %p192 = por %p190, %p191
      %p193 = scmp.ne.s32.totalorder %s181, %s182
      %p194 = scmp.eq.s32.totalorder %s25, 3
      %p195 = por %p193, %p194
      %p197 = scmp.ne.s32.totalorder %s182, %s196
      %p198 = scmp.eq.s32.totalorder %s25, 0
      %p199 = por %p197, %p198
      %s200 = ssub.s32 %s26, %s38
      %s201 = ssub.s32 %s27, %s34
      %s202 = sor.u32 %s200, %s201
      %p203 = scmp.eq.s32.totalorder %s202, 0
      %s205 = sadd.s32 %s204, 1
      %s206 = scalar_select %p203, %s204, %s205
      %p209 = pneg %p203
      %p210 = scmp.eq.s32.totalorder %s19, 3
      %p211 = por %p209, %p210
      %p212 = scmp.ne.s32.totalorder %s204, %s207
      %p213 = scmp.eq.s32.totalorder %s19, 0
      %p214 = por %p212, %p213
      %p215 = scmp.ne.s32.totalorder %s204, %s207
      %p216 = scmp.eq.s32.totalorder %s24, 3
      %p217 = por %p215, %p216
      %p218 = scmp.ne.s32.totalorder %s207, %s208
      %p219 = scmp.eq.s32.totalorder %s24, 0
      %p220 = por %p218, %p219
      %p221 = scmp.ne.s32.totalorder %s207, %s208
      %p222 = scmp.eq.s32.totalorder %s25, 3
      %p223 = por %p221, %p222
      %p225 = scmp.ne.s32.totalorder %s208, %s224
      %p226 = scmp.eq.s32.totalorder %s25, 0
      %p227 = por %p225, %p226
      %p228 = scmp.le.s32.totalorder 1, %s19
      %p229 = scmp.lt.s32.totalorder %s19, 5
      %p230 = pnand %p228, %p229
      %p231 = pneg %p230
      // Predicated region
      $region9: #{tpu_custom_call.1} parent=5 // pred_check
        _
      $region10: #{tpu_custom_call.1} parent=5 // pred_check_branch
        %233 = sbr.rel (%p230) target = $region12
      $region11: #{tpu_custom_call.1} parent=5 // pred_region
        %s234 = ssub.s32 %s19, 1
        // Predicated region
        $region13: #{tpu_custom_call.1} parent=11 // pred_check
          %p235 = pneg %p108
        $region14: #{tpu_custom_call.1} parent=11 // pred_check_branch
          %237 = sbr.rel (%p235) target = $region16
        $region15: #{tpu_custom_call.1} parent=11 // pred_region
          _
        $region16: #{tpu_custom_call.1} parent=11 // pred_fallthru
          _
        // Predicated region
        $region17: #{tpu_custom_call.1} parent=11 // pred_check
          %p238 = pneg %p129
        $region18: #{tpu_custom_call.1} parent=11 // pred_check_branch
          %240 = sbr.rel (%p238) target = $region20
        $region19: #{tpu_custom_call.1} parent=11 // pred_region
          _
        $region20: #{tpu_custom_call.1} parent=11 // pred_fallthru
          _
        // Predicated region
        $region21: #{tpu_custom_call.1} parent=11 // pred_check
          %p241 = pneg %p150
        $region22: #{tpu_custom_call.1} parent=11 // pred_check_branch
          %243 = sbr.rel (%p241) target = $region24
        $region23: #{tpu_custom_call.1} parent=11 // pred_region
          _
        $region24: #{tpu_custom_call.1} parent=11 // pred_fallthru
          _
        // Predicated region
        $region25: #{tpu_custom_call.1} parent=11 // pred_check
          %p244 = pneg %p171
        $region26: #{tpu_custom_call.1} parent=11 // pred_check_branch
          %246 = sbr.rel (%p244) target = $region28
        $region27: #{tpu_custom_call.1} parent=11 // pred_region
          _
        $region28: #{tpu_custom_call.1} parent=11 // pred_fallthru
          _
        // Predicated region
        $region29: #{tpu_custom_call.1} parent=11 // pred_check
          %p247 = pneg %p192
        $region30: #{tpu_custom_call.1} parent=11 // pred_check_branch
          %249 = sbr.rel (%p247) target = $region32
        $region31: #{tpu_custom_call.1} parent=11 // pred_region
          _
        $region32: #{tpu_custom_call.1} parent=11 // pred_fallthru
          _
      $region12: #{tpu_custom_call.1} parent=5 // pred_fallthru
        _
      %p250 = scmp.lt.s32.totalorder %s19, 4
      // Predicated region
      $region33: #{tpu_custom_call.1} parent=5 // pred_check
        %p251 = pneg %p250
      $region34: #{tpu_custom_call.1} parent=5 // pred_check_branch
        %253 = sbr.rel (%p251) target = $region36
      $region35: #{tpu_custom_call.1} parent=5 // pred_region
        // Predicated region
        $region37: #{tpu_custom_call.1} parent=35 // pred_check
          %p254 = pneg %p53
        $region38: #{tpu_custom_call.1} parent=35 // pred_check_branch
          %256 = sbr.rel (%p254) target = $region40
        $region39: #{tpu_custom_call.1} parent=35 // pred_region
          %p257 = scmp.lt.s32.totalorder %s26, 1
          %s258 = scalar_select %p257, %s26, 1
          %p259 = scmp.lt.s32.totalorder %s27, 1
          %s260 = scalar_select %p259, %s27, 1
          %s261 = smul.addr %s258, 2
          %s262 = sadd.s32 %s260, %s261
          %s263 = smul.addr %s262, 4
          %s264 = scalar_lea.vmem %s0, %s263
        $region40: #{tpu_custom_call.1} parent=35 // pred_fallthru
          _
        // Predicated region
        $region41: #{tpu_custom_call.1} parent=35 // pred_check
          %p265 = pneg %p81
        $region42: #{tpu_custom_call.1} parent=35 // pred_check_branch
          %267 = sbr.rel (%p265) target = $region44
        $region43: #{tpu_custom_call.1} parent=35 // pred_region
          %s268 = sand.u32 %s71, 1
          %s269 = scalar_lea.sflag [#allocation3], %s268
          %s270 = sand.u32 %s71, 1
          %s271 = smul.addr %s270, 8
          %s272 = scalar_lea.vmem [#allocation2], %s271
          %s274 = ssub.s32 128, 128
          %275 = vsyncadd %s269, %s274
          %s276 = smul.addr %s26, 2
          %s277 = sadd.s32 %s27, %s276
          %s278 = smul.addr %s277, 128
          %s279 = scalar_lea.hbm %s1, %s278
          %s281 = sshll.u32 %s272, 4
          %s282 = int_to_ptr.vmem [resolvable:$true] %s281
          %284 = dma.hbm_to_vmem [thread:$0]  %s279, 128, %s282, %s269
        $region44: #{tpu_custom_call.1} parent=35 // pred_fallthru
          _
      $region36: #{tpu_custom_call.1} parent=5 // pred_fallthru
        _
      %p285 = scmp.le.s32.totalorder 1, %s19
      %p286 = scmp.lt.s32.totalorder %s19, 5
      %p287 = pnand %p285, %p286
      %p288 = pneg %p287
      // Predicated region
      $region45: #{tpu_custom_call.1} parent=5 // pred_check
        _
      $region46: #{tpu_custom_call.1} parent=5 // pred_check_branch
        %290 = sbr.rel (%p287) target = $region48
      $region47: #{tpu_custom_call.1} parent=5 // pred_region
        %s291 = ssub.s32 %s19, 1
        %s292 = sand.u32 %s74, 1
        %s293 = scalar_lea.sflag [#allocation3], %s292
        %s294 = sand.u32 %s74, 1
        %s295 = smul.addr %s294, 8
        %s296 = scalar_lea.vmem [#allocation2], %s295
        // Predicated region
        $region49: #{tpu_custom_call.1} parent=47 // pred_check
          %p297 = pneg %p87
        $region50: #{tpu_custom_call.1} parent=47 // pred_check_branch
          %299 = sbr.rel (%p297) target = $region52
        $region51: #{tpu_custom_call.1} parent=47 // pred_region
          %300 = dma.done %s293, 128
        $region52: #{tpu_custom_call.1} parent=47 // pred_fallthru
          _
        %p301 = scmp.lt.s32.totalorder %s28, 1
        %s302 = scalar_select %p301, %s28, 1
        %p303 = scmp.lt.s32.totalorder %s29, 1
        %s304 = scalar_select %p303, %s29, 1
        %s305 = smul.addr %s302, 2
        %s306 = sadd.s32 %s304, %s305
        %s307 = smul.addr %s306, 4
        %s308 = scalar_lea.vmem %s0, %s307
        %p309 = pneg %p59
        %p310 = pneg %p56
        %s311 = sand.u32 %s74, 1
        %s312 = scalar_lea.sflag [#allocation3], %s311
        %s313 = sand.u32 %s74, 1
        %s314 = smul.addr %s313, 8
        %s315 = scalar_lea.vmem [#allocation2], %s314
        %p316 = pneg %p87
        %p317 = pneg %p84
        %p318 = pneg %p108
        %p319 = pneg %p105
        %p320 = pneg %p129
        %p321 = pneg %p126
        %p322 = pneg %p150
        %p323 = pneg %p147
        %p324 = pneg %p171
        %p325 = pneg %p168
        %p326 = pneg %p192
        %p327 = pneg %p189
        %p328 = pneg %p220
        %p329 = pneg %p217
        %s330 = sand.u32 %s207, 1
        %s331 = scalar_lea.sflag [#allocation4], %s330
        %s332 = sand.u32 %s207, 1
        %s333 = smul.addr %s332, 4
        %s334 = scalar_lea.vmem [#allocation5], %s333
        %p335 = scmp.lt.s32.totalorder %s28, 1
        %s336 = scalar_select %p335, %s28, 1
        %p337 = scmp.lt.s32.totalorder %s29, 1
        %s338 = scalar_select %p337, %s29, 1
        %s339 = smul.addr %s336, 2
        %s340 = sadd.s32 %s338, %s339
        %s341 = smul.addr %s340, 4
        %s342 = scalar_lea.vmem %s0, %s341
        %v343 = vld [vmem:[%s342] sm:$0xf]
        %v344 = vld [vmem:[%s3] sm:$0xff]
        %v345 = vld [vmem:[%s4] sm:$0xff]
        %347 = vset.pattern.permute.xlu0 0
        %348 = vperm.xlu0 %347, %v345
        %v349 = vpop.permute.xlu0 %348
        %vm351 = vcmask 31744
        %v353 = vsel %vm351, %v344, 0
        %vm355 = vcmask 1043456
        %v357 = vsel %vm355, %v343, 0
        %359 = vmatprep.subr.mxu0 0.0
        %360 = vmatpush1.msra.mxu0 %v357
        %361 = vmatprep.subr.mxu0 0.0
        %362 = vmatpush1.msra.mxu0 0.0
        %363 = vmatprep.subr.mxu0 0.0
        %364 = vmatpush1.msra.mxu0 0.0
        %365 = vmatprep.subr.mxu0 0.0
        %366 = vmatpush1.msra.mxu0 0.0
        %367 = vmatprep.subr.mxu0 0.0
        %368 = vmatpush1.msra.mxu0 0.0
        %369 = vmatprep.subr.mxu0 0.0
        %370 = vmatpush1.msra.mxu0 0.0
        %371 = vmatprep.subr.mxu0 0.0
        %372 = vmatpush1.msra.mxu0 0.0
        %373 = vmatprep.subr.mxu0 0.0
        %374 = vmatpush1.msra.mxu0 0.0
        %375 = vmatprep.subr.mxu0 0.0
        %376 = vmatpush1.msra.mxu0 0.0
        %377 = vmatprep.subr.mxu0 0.0
        %378 = vmatpush1.msra.mxu0 0.0
        %379 = vmatprep.subr.mxu0 0.0
        %380 = vmatpush1.msra.mxu0 0.0
        %381 = vmatprep.subr.mxu0 0.0
        %382 = vmatpush1.msra.mxu0 0.0
        %383 = vmatprep.subr.mxu0 0.0
        %384 = vmatpush1.msra.mxu0 0.0
        %385 = vmatprep.subr.mxu0 0.0
        %386 = vmatpush1.msra.mxu0 0.0
        %387 = vmatprep.subr.mxu0 0.0
        %388 = vmatpush1.msra.mxu0 0.0
        %389 = vmatprep.subr.mxu0 0.0
        %390 = vmatpush1.msra.mxu0 0.0
        %391 = vmatprep.subr.mxu0 0.0
        %392 = vmatpush1.msra.mxu0 0.0
        %393 = vmatprep.subr.mxu0 0.0
        %394 = vmatpush1.msra.mxu0 0.0
        %395 = vmatprep.subr.mxu0 0.0
        %396 = vmatpush1.msra.mxu0 0.0
        %397 = vmatprep.subr.mxu0 0.0
        %398 = vmatpush1.msra.mxu0 0.0
        %399 = vmatprep.subr.mxu0 0.0
        %400 = vmatpush1.msra.mxu0 0.0
        %401 = vmatprep.subr.mxu0 0.0
        %402 = vmatpush1.msra.mxu0 0.0
        %403 = vmatprep.subr.mxu0 0.0
        %404 = vmatpush1.msra.mxu0 0.0
        %405 = vmatprep.subr.mxu0 0.0
        %406 = vmatpush1.msra.mxu0 0.0
        %407 = vmatprep.subr.mxu0 0.0
        %408 = vmatpush1.msra.mxu0 0.0
        %409 = vmatprep.subr.mxu0 0.0
        %410 = vmatpush1.msra.mxu0 0.0
        %411 = vmatprep.subr.mxu0 0.0
        %412 = vmatpush1.msra.mxu0 0.0
        %413 = vmatprep.subr.mxu0 0.0
        %414 = vmatpush1.msra.mxu0 0.0
        %415 = vmatprep.subr.mxu0 0.0
        %416 = vmatpush1.msra.mxu0 0.0
        %417 = vmatprep.subr.mxu0 0.0
        %418 = vmatpush1.msra.mxu0 0.0
        %419 = vmatprep.subr.mxu0 0.0
        %420 = vmatpush1.msra.mxu0 0.0
        %421 = vmatprep.subr.mxu0 0.0
        %422 = vmatpush1.msra.mxu0 0.0
        %423 = vmatprep.mubr.f32.mxu0 0.0
        %424 = vmatmul.mubr.f32.gmra.mrb[0].mxu0 %v353
        %v425 = vpop.f32.mrb[0].mxu0
        %v426 = vadd.f32 %v349, %v425
        %v427 = vpop.f32.mrb[0].mxu0
        %428 = vdwg.mxu0
        %v429 = vld [vmem:[%s296] sm:$0xff]
        %p430 = scmp.gt.s32.totalorder %s29, 0
        %s431 = scalar_select %p430, 1.0, 0.0
        %p432 = scmp.lt.s32.totalorder %s29, 1
        %s433 = scalar_select %p432, 1.0, 0.0
        %v435 = vsel %vm355, %v429, 0
        %437 = vmatprep.subr.mxu0 0.0
        %438 = vmatpush1.msra.mxu0 %v435
        %439 = vmatprep.subr.mxu0 0.0
        %440 = vmatpush1.msra.mxu0 0.0
        %441 = vmatprep.subr.mxu0 0.0
        %442 = vmatpush1.msra.mxu0 0.0
        %443 = vmatprep.subr.mxu0 0.0
        %444 = vmatpush1.msra.mxu0 0.0
        %445 = vmatprep.subr.mxu0 0.0
        %446 = vmatpush1.msra.mxu0 0.0
        %447 = vmatprep.subr.mxu0 0.0
        %448 = vmatpush1.msra.mxu0 0.0
        %449 = vmatprep.subr.mxu0 0.0
        %450 = vmatpush1.msra.mxu0 0.0
        %451 = vmatprep.subr.mxu0 0.0
        %452 = vmatpush1.msra.mxu0 0.0
        %453 = vmatprep.subr.mxu0 0.0
        %454 = vmatpush1.msra.mxu0 0.0
        %455 = vmatprep.subr.mxu0 0.0
        %456 = vmatpush1.msra.mxu0 0.0
        %457 = vmatprep.subr.mxu0 0.0
        %458 = vmatpush1.msra.mxu0 0.0
        %459 = vmatprep.subr.mxu0 0.0
        %460 = vmatpush1.msra.mxu0 0.0
        %461 = vmatprep.subr.mxu0 0.0
        %462 = vmatpush1.msra.mxu0 0.0
        %463 = vmatprep.subr.mxu0 0.0
        %464 = vmatpush1.msra.mxu0 0.0
        %465 = vmatprep.subr.mxu0 0.0
        %466 = vmatpush1.msra.mxu0 0.0
        %467 = vmatprep.subr.mxu0 0.0
        %468 = vmatpush1.msra.mxu0 0.0
        %469 = vmatprep.subr.mxu0 0.0
        %470 = vmatpush1.msra.mxu0 0.0
        %471 = vmatprep.subr.mxu0 0.0
        %472 = vmatpush1.msra.mxu0 0.0
        %473 = vmatprep.subr.mxu0 0.0
        %474 = vmatpush1.msra.mxu0 0.0
        %475 = vmatprep.subr.mxu0 0.0
        %476 = vmatpush1.msra.mxu0 0.0
        %477 = vmatprep.subr.mxu0 0.0
        %478 = vmatpush1.msra.mxu0 0.0
        %479 = vmatprep.subr.mxu0 0.0
        %480 = vmatpush1.msra.mxu0 0.0
        %481 = vmatprep.subr.mxu0 0.0
        %482 = vmatpush1.msra.mxu0 0.0
        %483 = vmatprep.subr.mxu0 0.0
        %484 = vmatpush1.msra.mxu0 0.0
        %485 = vmatprep.subr.mxu0 0.0
        %486 = vmatpush1.msra.mxu0 0.0
        %487 = vmatprep.subr.mxu0 0.0
        %488 = vmatpush1.msra.mxu0 0.0
        %489 = vmatprep.subr.mxu0 0.0
        %490 = vmatpush1.msra.mxu0 0.0
        %491 = vmatprep.subr.mxu0 0.0
        %492 = vmatpush1.msra.mxu0 0.0
        %493 = vmatprep.subr.mxu0 0.0
        %494 = vmatpush1.msra.mxu0 0.0
        %495 = vmatprep.subr.mxu0 0.0
        %496 = vmatpush1.msra.mxu0 0.0
        %497 = vmatprep.subr.mxu0 0.0
        %498 = vmatpush1.msra.mxu0 0.0
        %499 = vmatprep.subr.mxu0 0.0
        %500 = vmatpush1.msra.mxu0 0.0
        %501 = vmatprep.mubr.f32.mxu0 0.0
        %502 = vmatmul.mubr.f32.gmra.mrb[0].mxu0 %v353
        %v503 = vpop.f32.mrb[0].mxu0
        %v504 = vadd.f32 %v349, %v503
        %v505 = vpop.f32.mrb[0].mxu0
        %506 = vdwg.mxu0
        %v507 = vstv %s431
        %v508 = vmul.f32 %v504, %v507
        %v509 = vrot.slane %v429, 4
        %v510 = vsel %vm355, %v509, 0
        %512 = vmatprep.subr.mxu0 0.0
        %513 = vmatpush1.msra.mxu0 %v510
        %514 = vmatprep.subr.mxu0 0.0
        %515 = vmatpush1.msra.mxu0 0.0
        %516 = vmatprep.subr.mxu0 0.0
        %517 = vmatpush1.msra.mxu0 0.0
        %518 = vmatprep.subr.mxu0 0.0
        %519 = vmatpush1.msra.mxu0 0.0
        %520 = vmatprep.subr.mxu0 0.0
        %521 = vmatpush1.msra.mxu0 0.0
        %522 = vmatprep.subr.mxu0 0.0
        %523 = vmatpush1.msra.mxu0 0.0
        %524 = vmatprep.subr.mxu0 0.0
        %525 = vmatpush1.msra.mxu0 0.0
        %526 = vmatprep.subr.mxu0 0.0
        %527 = vmatpush1.msra.mxu0 0.0
        %528 = vmatprep.subr.mxu0 0.0
        %529 = vmatpush1.msra.mxu0 0.0
        %530 = vmatprep.subr.mxu0 0.0
        %531 = vmatpush1.msra.mxu0 0.0
        %532 = vmatprep.subr.mxu0 0.0
        %533 = vmatpush1.msra.mxu0 0.0
        %534 = vmatprep.subr.mxu0 0.0
        %535 = vmatpush1.msra.mxu0 0.0
        %536 = vmatprep.subr.mxu0 0.0
        %537 = vmatpush1.msra.mxu0 0.0
        %538 = vmatprep.subr.mxu0 0.0
        %539 = vmatpush1.msra.mxu0 0.0
        %540 = vmatprep.subr.mxu0 0.0
        %541 = vmatpush1.msra.mxu0 0.0
        %542 = vmatprep.subr.mxu0 0.0
        %543 = vmatpush1.msra.mxu0 0.0
        %544 = vmatprep.subr.mxu0 0.0
        %545 = vmatpush1.msra.mxu0 0.0
        %546 = vmatprep.subr.mxu0 0.0
        %547 = vmatpush1.msra.mxu0 0.0
        %548 = vmatprep.subr.mxu0 0.0
        %549 = vmatpush1.msra.mxu0 0.0
        %550 = vmatprep.subr.mxu0 0.0
        %551 = vmatpush1.msra.mxu0 0.0
        %552 = vmatprep.subr.mxu0 0.0
        %553 = vmatpush1.msra.mxu0 0.0
        %554 = vmatprep.subr.mxu0 0.0
        %555 = vmatpush1.msra.mxu0 0.0
        %556 = vmatprep.subr.mxu0 0.0
        %557 = vmatpush1.msra.mxu0 0.0
        %558 = vmatprep.subr.mxu0 0.0
        %559 = vmatpush1.msra.mxu0 0.0
        %560 = vmatprep.subr.mxu0 0.0
        %561 = vmatpush1.msra.mxu0 0.0
        %562 = vmatprep.subr.mxu0 0.0
        %563 = vmatpush1.msra.mxu0 0.0
        %564 = vmatprep.subr.mxu0 0.0
        %565 = vmatpush1.msra.mxu0 0.0
        %566 = vmatprep.subr.mxu0 0.0
        %567 = vmatpush1.msra.mxu0 0.0
        %568 = vmatprep.subr.mxu0 0.0
        %569 = vmatpush1.msra.mxu0 0.0
        %570 = vmatprep.subr.mxu0 0.0
        %571 = vmatpush1.msra.mxu0 0.0
        %572 = vmatprep.subr.mxu0 0.0
        %573 = vmatpush1.msra.mxu0 0.0
        %574 = vmatprep.subr.mxu0 0.0
        %575 = vmatpush1.msra.mxu0 0.0
        %576 = vmatprep.mubr.f32.mxu0 0.0
        %577 = vmatmul.mubr.f32.gmra.mrb[0].mxu0 %v353
        %v578 = vpop.f32.mrb[0].mxu0
        %v579 = vadd.f32 %v349, %v578
        %v580 = vpop.f32.mrb[0].mxu0
        %581 = vdwg.mxu0
        %v582 = vstv %s433
        %v583 = vmul.f32 %v579, %v582
        %585 = vrot.lane.b32.xlu0 %v508, 1
        %v586 = vpop.permute.xlu0 %585
        %589 = vrot.lane.b32.xlu0 %v426, 17
        %v590 = vpop.permute.xlu0 %589
        %593 = vrot.lane.b32.xlu0 %v583, 17
        %v594 = vpop.permute.xlu0 %593
        %vm596 = vcmask 7168
        %v597 = vsel %vm596, 0.0, %v586
        %vm598 = vcmask 138240
        %v599 = vsel %vm598, %v597, %v590
        %v600 = vsel %vm598, %v590, %v594
        %vm601 = vcmask 269312
        %v602 = vsel %vm601, %v600, 0.0
        %v603 = vld [vmem:[%s2] sm:$0x1]
        %v604 = vld [vmem:[%s2 + $0x1] sm:$0x1]
        %v605 = vlaneseq
        %v606 = vshrl.u32 %v605, 7
        %v607 = vsub.s32 0, %v606
        %v608 = vrot.slane %v603, %v607
        %v609 = vmul.f32 %v599, %v608
        %v610 = vlaneseq
        %v611 = vshrl.u32 %v610, 7
        %v612 = vsub.s32 0, %v611
        %v613 = vrot.slane %v604, %v612
        %615 = vrot.lane.b32.xlu0 %v613, 2
        %v616 = vpop.permute.xlu0 %615
        %v618 = vmul.f32 %v599, %v616
        %v619 = vmul.f32 %v602, %v616
        %621 = vrot.lane.b32.xlu0 %v608, 16
        %v622 = vpop.permute.xlu0 %621
        %v624 = vmul.f32 %v599, %v622
        %v625 = vmul.f32 %v602, %v622
        %626 = vrot.lane.b32.xlu0 %v613, 18
        %v627 = vpop.permute.xlu0 %626
        %v629 = vmul.f32 %v599, %v627
        %v630 = vmul.f32 %v602, %v627
        %631 = vrot.lane.b32.xlu0 %v608, 32
        %v632 = vpop.permute.xlu0 %631
        %v634 = vmul.f32 %v599, %v632
        %v635 = vmul.f32 %v602, %v632
        %636 = vrot.lane.b32.xlu0 %v613, 34
        %v637 = vpop.permute.xlu0 %636
        %v639 = vmul.f32 %v599, %v637
        %v640 = vmul.f32 %v602, %v637
        %643 = vrot.lane.b32.xlu0 %v599, 127
        %v644 = vpop.permute.xlu0 %643
        %645 = vrot.lane.b32.xlu0 %v602, 127
        %v646 = vpop.permute.xlu0 %645
        %vm647 = vcmask 1039360
        %v648 = vsel %vm647, %v644, %v646
        %652 = vrot.lane.b32.xlu0 %v618, 126
        %v653 = vpop.permute.xlu0 %652
        %654 = vrot.lane.b32.xlu0 %v619, 126
        %v655 = vpop.permute.xlu0 %654
        %vm656 = vcmask 1031168
        %v657 = vsel %vm656, %v653, %v655
        %661 = vrot.lane.b32.xlu0 %v624, 112
        %v662 = vpop.permute.xlu0 %661
        %663 = vrot.lane.b32.xlu0 %v625, 112
        %v664 = vpop.permute.xlu0 %663
        %vm665 = vcmask 916480
        %v666 = vsel %vm665, %v662, %v664
        %668 = vrot.lane.b32.xlu0 %v599, 111
        %v669 = vpop.permute.xlu0 %668
        %670 = vrot.lane.b32.xlu0 %v602, 111
        %v671 = vpop.permute.xlu0 %670
        %vm672 = vcmask 908288
        %v673 = vsel %vm672, %v669, %v671
        %677 = vrot.lane.b32.xlu0 %v629, 110
        %v678 = vpop.permute.xlu0 %677
        %679 = vrot.lane.b32.xlu0 %v630, 110
        %v680 = vpop.permute.xlu0 %679
        %vm681 = vcmask 900096
        %v682 = vsel %vm681, %v678, %v680
        %686 = vrot.lane.b32.xlu0 %v634, 96
        %v687 = vpop.permute.xlu0 %686
        %688 = vrot.lane.b32.xlu0 %v635, 96
        %v689 = vpop.permute.xlu0 %688
        %vm690 = vcmask 785408
        %v691 = vsel %vm690, %v687, %v689
        %693 = vrot.lane.b32.xlu0 %v599, 95
        %v694 = vpop.permute.xlu0 %693
        %695 = vrot.lane.b32.xlu0 %v602, 95
        %v696 = vpop.permute.xlu0 %695
        %vm697 = vcmask 777216
        %v698 = vsel %vm697, %v694, %v696
        %702 = vrot.lane.b32.xlu0 %v639, 94
        %v703 = vpop.permute.xlu0 %702
        %704 = vrot.lane.b32.xlu0 %v640, 94
        %v705 = vpop.permute.xlu0 %704
        %vm706 = vcmask 769024
        %v707 = vsel %vm706, %v703, %v705
        %v709 = vld [vmem:[%s5] sm:$0xf]
        %v710 = vld [vmem:[%s6] sm:$0xf]
        %712 = vset.pattern.permute.xlu0 0
        %713 = vperm.xlu0 %712, %v710
        %v714 = vpop.permute.xlu0 %713
        %vm716 = vcmask 588800
        %v718 = vsel %vm716, %v709, 0
        %720 = vmatprep.subr.mxu0 0.0
        %721 = vmatpush1.msra.mxu0 %v609
        %722 = vmatprep.subr.mxu0 0.0
        %723 = vmatpush1.msra.mxu0 %v648
        %724 = vmatprep.subr.mxu0 0.0
        %725 = vmatpush1.msra.mxu0 %v657
        %726 = vmatprep.subr.mxu0 0.0
        %727 = vmatpush1.msra.mxu0 %v666
        %728 = vmatprep.subr.mxu0 0.0
        %729 = vmatpush1.msra.mxu0 %v673
        %730 = vmatprep.subr.mxu0 0.0
        %731 = vmatpush1.msra.mxu0 %v682
        %732 = vmatprep.subr.mxu0 0.0
        %733 = vmatpush1.msra.mxu0 %v691
        %734 = vmatprep.subr.mxu0 0.0
        %735 = vmatpush1.msra.mxu0 %v698
        %736 = vmatprep.subr.mxu0 0.0
        %737 = vmatpush1.msra.mxu0 %v707
        %738 = vmatprep.subr.mxu0 0.0
        %739 = vmatpush1.msra.mxu0 0.0
        %740 = vmatprep.subr.mxu0 0.0
        %741 = vmatpush1.msra.mxu0 0.0
        %742 = vmatprep.subr.mxu0 0.0
        %743 = vmatpush1.msra.mxu0 0.0
        %744 = vmatprep.subr.mxu0 0.0
        %745 = vmatpush1.msra.mxu0 0.0
        %746 = vmatprep.subr.mxu0 0.0
        %747 = vmatpush1.msra.mxu0 0.0
        %748 = vmatprep.subr.mxu0 0.0
        %749 = vmatpush1.msra.mxu0 0.0
        %750 = vmatprep.subr.mxu0 0.0
        %751 = vmatpush1.msra.mxu0 0.0
        %752 = vmatprep.subr.mxu0 0.0
        %753 = vmatpush1.msra.mxu0 0.0
        %754 = vmatprep.subr.mxu0 0.0
        %755 = vmatpush1.msra.mxu0 0.0
        %756 = vmatprep.subr.mxu0 0.0
        %757 = vmatpush1.msra.mxu0 0.0
        %758 = vmatprep.subr.mxu0 0.0
        %759 = vmatpush1.msra.mxu0 0.0
        %760 = vmatprep.subr.mxu0 0.0
        %761 = vmatpush1.msra.mxu0 0.0
        %762 = vmatprep.subr.mxu0 0.0
        %763 = vmatpush1.msra.mxu0 0.0
        %764 = vmatprep.subr.mxu0 0.0
        %765 = vmatpush1.msra.mxu0 0.0
        %766 = vmatprep.subr.mxu0 0.0
        %767 = vmatpush1.msra.mxu0 0.0
        %768 = vmatprep.subr.mxu0 0.0
        %769 = vmatpush1.msra.mxu0 0.0
        %770 = vmatprep.subr.mxu0 0.0
        %771 = vmatpush1.msra.mxu0 0.0
        %772 = vmatprep.subr.mxu0 0.0
        %773 = vmatpush1.msra.mxu0 0.0
        %774 = vmatprep.subr.mxu0 0.0
        %775 = vmatpush1.msra.mxu0 0.0
        %776 = vmatprep.subr.mxu0 0.0
        %777 = vmatpush1.msra.mxu0 0.0
        %778 = vmatprep.subr.mxu0 0.0
        %779 = vmatpush1.msra.mxu0 0.0
        %780 = vmatprep.subr.mxu0 0.0
        %781 = vmatpush1.msra.mxu0 0.0
        %782 = vmatprep.subr.mxu0 0.0
        %783 = vmatpush1.msra.mxu0 0.0
        %784 = vmatprep.mubr.f32.mxu0 0.0
        %785 = vmatmul.mubr.f32.gmra.mrb[0].mxu0 %v718
        %v786 = vpop.f32.mrb[0].mxu0
        %v787 = vadd.f32 %v714, %v786
        %v788 = vpop.f32.mrb[0].mxu0
        %789 = vdwg.mxu0
        %v790 = vadd.f32 %v787, %v343
        %791 = vst [vmem:[%s334] sm:$0xf] %v790
        %s792 = sand.u32 %s207, 1
        %s793 = scalar_lea.sflag [#allocation4], %s792
        %s794 = sand.u32 %s207, 1
        %s795 = smul.addr %s794, 4
        %s796 = scalar_lea.vmem [#allocation5], %s795
        // Predicated region
        $region53: #{tpu_custom_call.1} parent=47 // pred_check
          %p797 = pneg %p217
        $region54: #{tpu_custom_call.1} parent=47 // pred_check_branch
          %799 = sbr.rel (%p797) target = $region56
        $region55: #{tpu_custom_call.1} parent=47 // pred_region
          %s801 = ssub.s32 64, 64
          %802 = vsyncadd %s793, %s801
          %s803 = smul.addr %s28, 2
          %s804 = sadd.s32 %s29, %s803
          %s805 = smul.addr %s804, 64
          %s806 = scalar_lea.hbm %s7, %s805
          %s808 = sshll.u32 %s796, 4
          %s809 = int_to_ptr.vmem [resolvable:$true] %s808
          %811 = dma.vmem_to_hbm [thread:$0]  %s809, 64, %s806, %s793
        $region56: #{tpu_custom_call.1} parent=47 // pred_fallthru
          _
      $region48: #{tpu_custom_call.1} parent=5 // pred_fallthru
        _
      %p812 = scmp.le.s32.totalorder 2, %s19
      // Predicated region
      $region57: #{tpu_custom_call.1} parent=5 // pred_check
        %p813 = pneg %p812
      $region58: #{tpu_custom_call.1} parent=5 // pred_check_branch
        %815 = sbr.rel (%p813) target = $region60
      $region59: #{tpu_custom_call.1} parent=5 // pred_region
        %s816 = ssub.s32 %s19, 2
        // Predicated region
        $region61: #{tpu_custom_call.1} parent=59 // pred_check
          %p817 = pneg %p223
        $region62: #{tpu_custom_call.1} parent=59 // pred_check_branch
          %819 = sbr.rel (%p817) target = $region64
        $region63: #{tpu_custom_call.1} parent=59 // pred_region
          %s820 = sand.u32 %s208, 1
          %s821 = scalar_lea.sflag [#allocation4], %s820
          %s822 = sand.u32 %s208, 1
          %s823 = smul.addr %s822, 4
          %s824 = scalar_lea.vmem [#allocation5], %s823
          %825 = dma.done %s821, 64
        $region64: #{tpu_custom_call.1} parent=59 // pred_fallthru
          _
      $region60: #{tpu_custom_call.1} parent=5 // pred_fallthru
        _
    $region6: #{tpu_custom_call.1} parent=1 // loop_footer
      %s23 = sadd.s32 1, %s19
    $region7: #{tpu_custom_call.1} parent=1 // loop_footer_branch
      %18 = sbr.rel target = $region3
    $region8: #{tpu_custom_call.1} parent=1 // loop_exit
      _
    %826 = vsyncpa [#allocation3], 1
    %s827 = scalar_lea.sflag [#allocation3], 1
    %828 = vsyncpa %s827, 1
    %829 = vsyncpa [#allocation4], 1
    %s830 = scalar_lea.sflag [#allocation4], 1
    %831 = vsyncpa %s830, 1

</llo_original>
